<compile_context>
chip_gen: v5e
topology: v5e:2x2
jax: 0.10.0
libtpu: 0.0.40
codegen_flags: <defaults>
</compile_context>

<pallas_src>
import functools
import math

import jax
import jax.numpy as jnp
from jax import lax
from jax.experimental import pallas as pl
from jax.experimental.pallas import tpu as pltpu  # noqa: F401  (TPU backend assumed)


def _round_up(x, m):
    return ((x + m - 1) // m) * m


def _attn_kernel(x_ref, w_ref, b_ref, o_ref, *, dk, lanes, mxu_dtype, approx_recip):
    """Single-invocation body.

    x_ref : (S, B, D)      input sequence, native PyTorch [SeqLen, Batch, Hidden]
    w_ref : (D, 3*lanes)   fused [Wv | Wq*scale | Wk], zero-padded per 128-lane chunk
    b_ref : (1, 3*lanes)   fused bias (f32), same padding
    o_ref : (S, B, Dk)     output
    """
    S, B, _ = x_ref.shape
    w = w_ref[...]                                       # (D, 3*lanes)  mxu_dtype
    bias = b_ref[...]                                    # (1, 3*lanes)  f32

    # B is tiny & static -> fully unrolled.  Per-b ref slices stay clean 2-D, so
    # no in-kernel relayout/transpose of the (S, B, D) block is needed.
    for bi in range(B):
        x_b = x_ref[:, bi, :].astype(mxu_dtype)          # (S, D)

        # Fused V/Q/K projection: one MXU pass, f32 accumulation, one bias add,
        # then a SINGLE cast back to the MXU dtype.
        proj = jnp.dot(x_b, w, preferred_element_type=jnp.float32) + bias
        proj = proj.astype(mxu_dtype)                    # (S, 3*lanes)

        # Lane-aligned whole-chunk picks (padding columns are exact zeros).
        v = proj[:, 0 * lanes:1 * lanes]                 # (S, lanes)
        q = proj[:, 1 * lanes:2 * lanes]                 # 1/sqrt(D) already folded in
        k = proj[:, 2 * lanes:3 * lanes]

        # logits = v @ q^T, contracting the last dims (zero padding contributes 0).
        # NOTE: Mosaic may lower the rhs-dim-1 contraction via one small XLU
        # transpose of q; at (S, lanes) = (8, 128) that is a single vxpose off
        # the VALU critical path, so we accept it.
        logits = lax.dot_general(v, q, (((1,), (1,)), ((), ())),
                                 preferred_element_type=jnp.float32)   # (S, S)

        # Numerically stable softmax, all f32; denominator via the EUP slot.
        logits = logits - jnp.max(logits, axis=-1, keepdims=True)
        p = jnp.exp(logits)
        p = p * pl.reciprocal(jnp.sum(p, axis=-1, keepdims=True), approx=approx_recip)

        out = jnp.dot(p.astype(mxu_dtype), k,
                      preferred_element_type=jnp.float32)              # (S, lanes)
        o_ref[:, bi, :] = out[:, :dk].astype(o_ref.dtype)


def make_fused_params(wv, bv, wq, bq, wk, bk, *, mxu_dtype=jnp.bfloat16):
    """Hoisted parameter fusion: call ONCE at init time, not per forward pass.

    Weights follow the x @ W convention: shape (dim_in, dim_out).
    Returns (w_fused, b_fused, dk, lanes).
    """
    D, dv = wv.shape
    dk = wk.shape[1]
    assert wq.shape[1] == dv, "query out-dim must match value out-dim (weights = V @ Q^T)"
    lanes = _round_up(max(dv, dk, 1), 128)               # one 128-lane chunk per projection

    scale = 1.0 / math.sqrt(float(D))

    def pad_cols(w, b):
        p = lanes - w.shape[1]
        return jnp.pad(w, ((0, 0), (0, p))), jnp.pad(b, ((0, p),))

    wv_p, bv_p = pad_cols(wv, bv)
    wq_p, bq_p = pad_cols(wq * scale, bq * scale)        # fold attention scale into Q
    wk_p, bk_p = pad_cols(wk, bk)

    w_fused = jnp.concatenate([wv_p, wq_p, wk_p], axis=1).astype(mxu_dtype)  # (D, 3*lanes)
    b_fused = jnp.concatenate([bv_p, bq_p, bk_p]).reshape(1, 3 * lanes).astype(jnp.float32)
    return w_fused, b_fused, dk, lanes


def transformer_attn_fused(seq, w_fused, b_fused, *, dk, mxu_dtype=jnp.bfloat16,
                           approx_recip=True):
    """Forward with pre-fused params. seq: [S, B, D]. Returns [S, B, Dk]."""
    S, B, D = seq.shape
    lanes = w_fused.shape[1] // 3

    kernel = functools.partial(_attn_kernel, dk=dk, lanes=lanes,
                               mxu_dtype=mxu_dtype, approx_recip=approx_recip)

    flops = B * (2 * S * D * 3 * lanes + 2 * S * S * lanes + 2 * S * S * lanes)
    bytes_accessed = (seq.size * seq.dtype.itemsize
                      + w_fused.size * w_fused.dtype.itemsize
                      + b_fused.size * 4
                      + S * B * dk * seq.dtype.itemsize)

    # No grid / no BlockSpecs: every operand is a single full-array VMEM block and
    # the kernel body runs exactly once (kills per-grid-step overhead and both of
    # the HBM transposes the previous version paid for).
    return pl.pallas_call(
        kernel,
        out_shape=jax.ShapeDtypeStruct((S, B, dk), seq.dtype),
        cost_estimate=pl.CostEstimate(flops=flops,
                                      transcendentals=B * S * S,
                                      bytes_accessed=bytes_accessed),
    )(seq, w_fused, b_fused)


def transformer_attn(seq, wv, bv, wq, bq, wk, bk, *, mxu_dtype=jnp.bfloat16,
                     approx_recip=True):
    """One-shot convenience wrapper.  For repeated calls, hoist make_fused_params."""
    w_fused, b_fused, dk, _ = make_fused_params(wv, bv, wq, bq, wk, bk,
                                                mxu_dtype=mxu_dtype)
    return transformer_attn_fused(seq, w_fused, b_fused, dk=dk,
                                  mxu_dtype=mxu_dtype, approx_recip=approx_recip)


def _reference(seq, wv, bv, wq, bq, wk, bk):
    """Plain-JAX mirror of the PyTorch forward for sanity checking."""
    x = jnp.transpose(seq, (1, 0, 2))                    # (B, S, D)
    v = x @ wv + bv
    q = x @ wq + bq
    k = x @ wk + bk
    w = jnp.einsum("bsd,btd->bst", v, q) / math.sqrt(seq.shape[-1])
    w = jax.nn.softmax(w, axis=-1)
    return jnp.transpose(jnp.einsum("bst,btd->bsd", w, k), (1, 0, 2))


if __name__ == "__main__":
    # Small shapes consistent with the module: seq_len=8, batch=2, hidden=32
    S, B, D = 8, 2, 32
    Dv = 32   # value_dim (== query output dim)
    Dk = 32   # key_dim

    key = jax.random.PRNGKey(0)
    ks = jax.random.split(key, 7)

    seq = jax.random.normal(ks[0], (S, B, D), dtype=jnp.float32)

    # Deterministic parameter init (PyTorch Linear stores (out, in); we store the
    # transposed (in, out) so the kernel can do x @ W directly).
    bound = 1.0 / math.sqrt(D)
    wv = jax.random.uniform(ks[1], (D, Dv), minval=-bound, maxval=bound, dtype=jnp.float32)
    bv = jax.random.uniform(ks[2], (Dv,),   minval=-bound, maxval=bound, dtype=jnp.float32)
    wq = jax.random.uniform(ks[3], (D, Dv), minval=-bound, maxval=bound, dtype=jnp.float32)
    bq = jax.random.uniform(ks[4], (Dv,),   minval=-bound, maxval=bound, dtype=jnp.float32)
    wk = jax.random.uniform(ks[5], (D, Dk), minval=-bound, maxval=bound, dtype=jnp.float32)
    bk = jax.random.uniform(ks[6], (Dk,),   minval=-bound, maxval=bound, dtype=jnp.float32)

    ref = _reference(seq, wv, bv, wq, bq, wk, bk)

    # Hoisted parameter fusion: done ONCE, outside the forward path.
    wf_bf16, bfb_bf16, dk, _ = make_fused_params(wv, bv, wq, bq, wk, bk,
                                                 mxu_dtype=jnp.bfloat16)
    out = jax.block_until_ready(transformer_attn_fused(seq, wf_bf16, bfb_bf16, dk=dk))
    assert out.shape == (S, B, Dk), out.shape
    assert jnp.allclose(out, ref, atol=5e-2, rtol=5e-2), \
        float(jnp.max(jnp.abs(out - ref)))

    # Bit-careful path (f32 MXU operands, exact reciprocal) for a tight check.
    wf_f32, bfb_f32, dk, _ = make_fused_params(wv, bv, wq, bq, wk, bk,
                                               mxu_dtype=jnp.float32)
    out_f32 = jax.block_until_ready(
        transformer_attn_fused(seq, wf_f32, bfb_f32, dk=dk,
                               mxu_dtype=jnp.float32, approx_recip=False))
    assert jnp.allclose(out_f32, ref, atol=1e-5, rtol=1e-5), \
        float(jnp.max(jnp.abs(out_f32 - ref)))

    print("KERNEL_OK")
</pallas_src>

<mosaic_0001>
module attributes {stable_mosaic.version = 11 : i64} {
  func.func @_attn_kernel(%arg0: memref<8x2x32xf32, #tpu.memory_space<vmem>>, %arg1: memref<32x384xbf16, #tpu.memory_space<vmem>>, %arg2: memref<1x384xf32, #tpu.memory_space<vmem>>, %arg3: memref<8x2x32xf32, #tpu.memory_space<vmem>>) attributes {dimension_semantics = [], scalar_prefetch = 0 : i64, scratch_operands = 0 : i64, tpu.core_type = #tpu.core_type<tc>} {
    %c0 = arith.constant 0 : index
    %c0_0 = arith.constant 0 : index
    %0 = vector.load %arg1[%c0, %c0_0] : memref<32x384xbf16, #tpu.memory_space<vmem>>, vector<32x384xbf16>
    %c0_1 = arith.constant 0 : index
    %c0_2 = arith.constant 0 : index
    %1 = vector.load %arg2[%c0_1, %c0_2] : memref<1x384xf32, #tpu.memory_space<vmem>>, vector<1x384xf32>
    %c0_3 = arith.constant 0 : index
    %c0_4 = arith.constant 0 : index
    %c0_5 = arith.constant 0 : index
    %2 = vector.load %arg0[%c0_3, %c0_4, %c0_5] : memref<8x2x32xf32, #tpu.memory_space<vmem>>, vector<8x1x32xf32>
    %3 = vector.shape_cast %2 : vector<8x1x32xf32> to vector<8x32xf32>
    %4 = arith.truncf %3 : vector<8x32xf32> to vector<8x32xbf16>
    %cst = arith.constant dense<0.000000e+00> : vector<8x384xf32>
    %5 = tpu.matmul %4, %0, %cst {dimension_numbers = #tpu.dot_dimension_numbers<[1], [0], [0], [1], [0, 0, 1, 1], [], []>} : vector<8x32xbf16>, vector<32x384xbf16>, vector<8x384xf32> -> vector<8x384xf32>
    %6 = vector.broadcast %1 : vector<1x384xf32> to vector<8x384xf32>
    %7 = arith.addf %5, %6 : vector<8x384xf32>
    %8 = arith.truncf %7 : vector<8x384xf32> to vector<8x384xbf16>
    %9 = vector.extract_strided_slice %8 {offsets = [0, 0], sizes = [8, 128], strides = [1, 1]} : vector<8x384xbf16> to vector<8x128xbf16>
    %10 = vector.extract_strided_slice %8 {offsets = [0, 128], sizes = [8, 128], strides = [1, 1]} : vector<8x384xbf16> to vector<8x128xbf16>
    %11 = vector.extract_strided_slice %8 {offsets = [0, 256], sizes = [8, 128], strides = [1, 1]} : vector<8x384xbf16> to vector<8x128xbf16>
    %cst_6 = arith.constant dense<0.000000e+00> : vector<8x8xf32>
    %12 = tpu.matmul %9, %10, %cst_6 {dimension_numbers = #tpu.dot_dimension_numbers<[1], [1], [0], [0], [0, 0, 1, 0], [], []>} : vector<8x128xbf16>, vector<8x128xbf16>, vector<8x8xf32> -> vector<8x8xf32>
    %cst_7 = arith.constant dense<0xFF800000> : vector<8xf32>
    %13 = vector.multi_reduction <maximumf>, %12, %cst_7 [1] : vector<8x8xf32> to vector<8xf32>
    %14 = vector.shape_cast %13 : vector<8xf32> to vector<8x1xf32>
    %15 = vector.broadcast %14 : vector<8x1xf32> to vector<8x8xf32>
    %16 = arith.subf %12, %15 : vector<8x8xf32>
    %17 = math.exp %16 : vector<8x8xf32>
    %cst_8 = arith.constant dense<0.000000e+00> : vector<8xf32>
    %18 = vector.multi_reduction <add>, %17, %cst_8 [1] : vector<8x8xf32> to vector<8xf32>
    %19 = vector.shape_cast %18 : vector<8xf32> to vector<8x1xf32>
    %20 = tpu.reciprocal %19 {approx = true} : vector<8x1xf32> -> vector<8x1xf32>
    %21 = vector.broadcast %20 : vector<8x1xf32> to vector<8x8xf32>
    %22 = arith.mulf %17, %21 : vector<8x8xf32>
    %23 = arith.truncf %22 : vector<8x8xf32> to vector<8x8xbf16>
    %cst_9 = arith.constant dense<0.000000e+00> : vector<8x128xf32>
    %24 = tpu.matmul %23, %11, %cst_9 {dimension_numbers = #tpu.dot_dimension_numbers<[1], [0], [0], [1], [0, 0, 1, 1], [], []>} : vector<8x8xbf16>, vector<8x128xbf16>, vector<8x128xf32> -> vector<8x128xf32>
    %25 = vector.extract_strided_slice %24 {offsets = [0, 0], sizes = [8, 32], strides = [1, 1]} : vector<8x128xf32> to vector<8x32xf32>
    %c0_10 = arith.constant 0 : index
    %c0_11 = arith.constant 0 : index
    %c0_12 = arith.constant 0 : index
    %26 = vector.load %arg3[%c0_10, %c0_11, %c0_12] : memref<8x2x32xf32, #tpu.memory_space<vmem>>, vector<8x1x32xf32>
    %27 = vector.shape_cast %26 : vector<8x1x32xf32> to vector<8x32xf32>
    %28 = vector.shape_cast %25 : vector<8x32xf32> to vector<8x1x32xf32>
    tpu.vector_store %arg3[%c0_10, %c0_11, %c0_12], %28 {strides = array<i32>} : memref<8x2x32xf32, #tpu.memory_space<vmem>>, vector<8x1x32xf32>,
    %c0_13 = arith.constant 0 : index
    %c1 = arith.constant 1 : index
    %c0_14 = arith.constant 0 : index
    %29 = vector.load %arg0[%c0_13, %c1, %c0_14] : memref<8x2x32xf32, #tpu.memory_space<vmem>>, vector<8x1x32xf32>
    %30 = vector.shape_cast %29 : vector<8x1x32xf32> to vector<8x32xf32>
    %31 = arith.truncf %30 : vector<8x32xf32> to vector<8x32xbf16>
    %cst_15 = arith.constant dense<0.000000e+00> : vector<8x384xf32>
    %32 = tpu.matmul %31, %0, %cst_15 {dimension_numbers = #tpu.dot_dimension_numbers<[1], [0], [0], [1], [0, 0, 1, 1], [], []>} : vector<8x32xbf16>, vector<32x384xbf16>, vector<8x384xf32> -> vector<8x384xf32>
    %33 = vector.broadcast %1 : vector<1x384xf32> to vector<8x384xf32>
    %34 = arith.addf %32, %33 : vector<8x384xf32>
    %35 = arith.truncf %34 : vector<8x384xf32> to vector<8x384xbf16>
    %36 = vector.extract_strided_slice %35 {offsets = [0, 0], sizes = [8, 128], strides = [1, 1]} : vector<8x384xbf16> to vector<8x128xbf16>
    %37 = vector.extract_strided_slice %35 {offsets = [0, 128], sizes = [8, 128], strides = [1, 1]} : vector<8x384xbf16> to vector<8x128xbf16>
    %38 = vector.extract_strided_slice %35 {offsets = [0, 256], sizes = [8, 128], strides = [1, 1]} : vector<8x384xbf16> to vector<8x128xbf16>
    %cst_16 = arith.constant dense<0.000000e+00> : vector<8x8xf32>
    %39 = tpu.matmul %36, %37, %cst_16 {dimension_numbers = #tpu.dot_dimension_numbers<[1], [1], [0], [0], [0, 0, 1, 0], [], []>} : vector<8x128xbf16>, vector<8x128xbf16>, vector<8x8xf32> -> vector<8x8xf32>
    %cst_17 = arith.constant dense<0xFF800000> : vector<8xf32>
    %40 = vector.multi_reduction <maximumf>, %39, %cst_17 [1] : vector<8x8xf32> to vector<8xf32>
    %41 = vector.shape_cast %40 : vector<8xf32> to vector<8x1xf32>
    %42 = vector.broadcast %41 : vector<8x1xf32> to vector<8x8xf32>
    %43 = arith.subf %39, %42 : vector<8x8xf32>
    %44 = math.exp %43 : vector<8x8xf32>
    %cst_18 = arith.constant dense<0.000000e+00> : vector<8xf32>
    %45 = vector.multi_reduction <add>, %44, %cst_18 [1] : vector<8x8xf32> to vector<8xf32>
    %46 = vector.shape_cast %45 : vector<8xf32> to vector<8x1xf32>
    %47 = tpu.reciprocal %46 {approx = true} : vector<8x1xf32> -> vector<8x1xf32>
    %48 = vector.broadcast %47 : vector<8x1xf32> to vector<8x8xf32>
    %49 = arith.mulf %44, %48 : vector<8x8xf32>
    %50 = arith.truncf %49 : vector<8x8xf32> to vector<8x8xbf16>
    %cst_19 = arith.constant dense<0.000000e+00> : vector<8x128xf32>
    %51 = tpu.matmul %50, %38, %cst_19 {dimension_numbers = #tpu.dot_dimension_numbers<[1], [0], [0], [1], [0, 0, 1, 1], [], []>} : vector<8x8xbf16>, vector<8x128xbf16>, vector<8x128xf32> -> vector<8x128xf32>
    %52 = vector.extract_strided_slice %51 {offsets = [0, 0], sizes = [8, 32], strides = [1, 1]} : vector<8x128xf32> to vector<8x32xf32>
    %c0_20 = arith.constant 0 : index
    %c1_21 = arith.constant 1 : index
    %c0_22 = arith.constant 0 : index
    %53 = vector.load %arg3[%c0_20, %c1_21, %c0_22] : memref<8x2x32xf32, #tpu.memory_space<vmem>>, vector<8x1x32xf32>
    %54 = vector.shape_cast %53 : vector<8x1x32xf32> to vector<8x32xf32>
    %55 = vector.shape_cast %52 : vector<8x32xf32> to vector<8x1x32xf32>
    tpu.vector_store %arg3[%c0_20, %c1_21, %c0_22], %55 {strides = array<i32>} : memref<8x2x32xf32, #tpu.memory_space<vmem>>, vector<8x1x32xf32>,
    return
  }
}

</mosaic_0001>

<llo_original>
// kernel: tpu_custom_call.1
$region0: #{tpu_custom_call.1}
  #allocation0 [shape = 'u32[]', space=smem, size = 0x4, offset = 0x4, fixed_abs, tag = 'smem constant byte address 0x4 - core index']
  #allocation1 [shape = 'u32[72,128]{1,0:T(1,128)}', space=vmem, size = 0x9000, scoped, tag = 'internal scratch']
  %s0 = inlined_call_operand.hbm [shape: f32[8,2,32], index: 0, kind: input, shape index: {}]
  %s1 = inlined_call_operand.hbm [shape: bf16[32,384], index: 1, kind: input, shape index: {}]
  %s2 = inlined_call_operand.hbm [shape: f32[1,384], index: 2, kind: input, shape index: {}]
  %s3 = inlined_call_operand.hbm [shape: f32[8,2,32], index: 3, kind: output, shape index: {}]
  %s4 = sld [smem:[#allocation0]]
  $region34: #{tpu_custom_call.1} parent=0
    _
  %s6 = ssub.s32 1, %s4
  %s7 = scalar_select 0, %s6, %s4
  $region1: #{tpu_custom_call.1} parent=0
    #allocation2 [shape = 'u8[8192]{0}', space=vmem, size = 0x2000, scoped, tag = 'input window, operand 0, single buffered']
    #allocation3 [shape = 's32[1]{0}', space=sflag, size = 0x4, scoped, tag = 'scoped memory for tpu_custom_call.1']
    #allocation4 [shape = 's32[1]{0}', space=sflag, size = 0x4, scoped, tag = 'scoped memory for tpu_custom_call.1']
    #allocation5 [shape = 'u8[24576]{0}', space=vmem, size = 0x6000, scoped, tag = 'input window, operand 1, single buffered']
    #allocation6 [shape = 's32[1]{0}', space=sflag, size = 0x4, scoped, tag = 'scoped memory for tpu_custom_call.1']
    #allocation7 [shape = 'u8[1536]{0}', space=vmem, size = 0x800, scoped, tag = 'input window, operand 2, single buffered']
    #allocation8 [shape = 'u8[8192]{0}', space=vmem, size = 0x2000, scoped, tag = 'output window, operand 0, single buffered']
    %8 = vsyncpa [#allocation3], 0
    %9 = vsyncpa [#allocation6], 0
    %10 = vsyncpa [#allocation4], 0
    // Predicated region
    $region2: #{tpu_custom_call.1} parent=1 // pred_check
      _
    $region3: #{tpu_custom_call.1} parent=1 // pred_check_branch
      %12 = sbr.rel (0) target = $region5
    $region4: #{tpu_custom_call.1} parent=1 // pred_region
      %14 = vsyncadd [#allocation3], 0
      %s15 = sshll.u32 %s0, 4
      %s16 = int_to_ptr.hbm [resolvable:$true] %s15
      %s17 = sshll.u32 [#allocation2], 4
      %s18 = int_to_ptr.vmem [resolvable:$true] %s17
      %23 = dma.hbm_to_vmem [thread:$0]  %s16, 256, %s18, [#allocation3], 32, 32, 2
    $region5: #{tpu_custom_call.1} parent=1 // pred_fallthru
      _
    // Predicated region
    $region6: #{tpu_custom_call.1} parent=1 // pred_check
      _
    $region7: #{tpu_custom_call.1} parent=1 // pred_check_branch
      %25 = sbr.rel (0) target = $region9
    $region8: #{tpu_custom_call.1} parent=1 // pred_region
      %27 = vsyncadd [#allocation6], 0
      %s28 = sshll.u32 %s1, 4
      %s29 = int_to_ptr.hbm [resolvable:$true] %s28
      %s30 = sshll.u32 [#allocation5], 4
      %s31 = int_to_ptr.vmem [resolvable:$true] %s30
      %36 = dma.hbm_to_vmem [thread:$0]  %s29, 768, %s31, [#allocation6], 192, 192, 12
    $region9: #{tpu_custom_call.1} parent=1 // pred_fallthru
      _
    // Predicated region
    $region10: #{tpu_custom_call.1} parent=1 // pred_check
      _
    $region11: #{tpu_custom_call.1} parent=1 // pred_check_branch
      %38 = sbr.rel (0) target = $region13
    $region12: #{tpu_custom_call.1} parent=1 // pred_region
      %40 = vsyncadd [#allocation6], 0
      %s42 = sshll.u32 %s2, 4
      %s43 = int_to_ptr.hbm [resolvable:$true] %s42
      %s44 = sshll.u32 [#allocation7], 4
      %s45 = int_to_ptr.vmem [resolvable:$true] %s44
      %47 = dma.hbm_to_vmem [thread:$0]  %s43, 48, %s45, [#allocation6]
    $region13: #{tpu_custom_call.1} parent=1 // pred_fallthru
      _
    // Predicated region
    $region14: #{tpu_custom_call.1} parent=1 // pred_check
      _
    $region15: #{tpu_custom_call.1} parent=1 // pred_check_branch
      %49 = sbr.rel (0) target = $region17
    $region16: #{tpu_custom_call.1} parent=1 // pred_region
      %51 = dma.done [#allocation3], 256
    $region17: #{tpu_custom_call.1} parent=1 // pred_fallthru
      _
    // Predicated region
    $region18: #{tpu_custom_call.1} parent=1 // pred_check
      _
    $region19: #{tpu_custom_call.1} parent=1 // pred_check_branch
      %53 = sbr.rel (0) target = $region21
    $region20: #{tpu_custom_call.1} parent=1 // pred_region
      %55 = dma.done [#allocation6], 768
    $region21: #{tpu_custom_call.1} parent=1 // pred_fallthru
      _
    // Predicated region
    $region22: #{tpu_custom_call.1} parent=1 // pred_check
      _
    $region23: #{tpu_custom_call.1} parent=1 // pred_check_branch
      %57 = sbr.rel (0) target = $region25
    $region24: #{tpu_custom_call.1} parent=1 // pred_region
      %59 = dma.done [#allocation6], 48
    $region25: #{tpu_custom_call.1} parent=1 // pred_fallthru
      _
    %v61 = vld [vmem:[#allocation5] sm:$0xff]
    %v62 = vld [vmem:[#allocation5 + $0x8] sm:$0xf]
    %v63 = vld [vmem:[#allocation5 + $0xc] sm:$0xff]
    %v64 = vld [vmem:[#allocation5 + $0x14] sm:$0xf]
    %v65 = vld [vmem:[#allocation5 + $0x18] sm:$0xff]
    %v66 = vld [vmem:[#allocation5 + $0x20] sm:$0xf]
    %v67 = vld [vmem:[#allocation5 + $0x24] sm:$0xff]
    %v68 = vld [vmem:[#allocation5 + $0x2c] sm:$0xf]
    %v69 = vld [vmem:[#allocation7] sm:$0x7]
    %v70 = vld [vmem:[#allocation2] sm:$0x1]
    %v71 = vld [vmem:[#allocation2 + $0x2] sm:$0x1]
    %v72 = vld [vmem:[#allocation2 + $0x4] sm:$0x1]
    %v73 = vld [vmem:[#allocation2 + $0x6] sm:$0x1]
    %v74 = vld [vmem:[#allocation2 + $0x8] sm:$0x1]
    %v75 = vld [vmem:[#allocation2 + $0xa] sm:$0x1]
    %v76 = vld [vmem:[#allocation2 + $0xc] sm:$0x1]
    %v77 = vld [vmem:[#allocation2 + $0xe] sm:$0x1]
    %v78 = vpack.c.bf16 %v70, %v70
    %v79 = vpack.c.bf16 %v71, %v71
    %v80 = vpack.c.bf16 %v72, %v72
    %v81 = vpack.c.bf16 %v73, %v73
    %v82 = vpack.c.bf16 %v74, %v74
    %v83 = vpack.c.bf16 %v75, %v75
    %v84 = vpack.c.bf16 %v76, %v76
    %v85 = vpack.c.bf16 %v77, %v77
    %v87 = vperm.slane %v69, 0
    %v88 = vperm.slane %v69, 1
    %v89 = vperm.slane %v69, 2
    %v101 = vunpack.c.l.b16 %v78
    %v102 = vunpack.c.l.b16 %v79
    %v103 = vunpack.c.l.b16 %v80
    %v104 = vunpack.c.l.b16 %v81
    %v105 = vunpack.c.l.b16 %v82
    %v106 = vunpack.c.l.b16 %v83
    %v107 = vunpack.c.l.b16 %v84
    %v108 = vunpack.c.l.b16 %v85
    %v109 = vrot.slane %v102, 7
    %vm110 = vcmask 1041409
    %v111 = vsel %vm110, %v109, %v101
    %v112 = vrot.slane %v103, 6
    %vm113 = vcmask 1042434
    %v114 = vsel %vm113, %v112, %v111
    %v115 = vrot.slane %v104, 5
    %vm116 = vcmask 1043459
    %v117 = vsel %vm116, %v115, %v114
    %v118 = vrot.slane %v105, 4
    %vm119 = vcmask 1044484
    %v120 = vsel %vm119, %v118, %v117
    %v121 = vrot.slane %v106, 3
    %vm122 = vcmask 1045509
    %v123 = vsel %vm122, %v121, %v120
    %v124 = vrot.slane %v107, 2
    %vm125 = vcmask 1046534
    %v126 = vsel %vm125, %v124, %v123
    %v127 = vrot.slane %v108, 1
    %vm128 = vcmask 1047559
    %v129 = vsel %vm128, %v127, %v126
    %v130 = vpack.c.b16 %v129, %v129
    %v139 = vunpack.c.l.b16 %v61
    %v140 = vunpack.c.h.b16 %v61
    %v141 = vunpack.c.l.b16 %v62
    %v142 = vunpack.c.l.b16 %v63
    %v143 = vunpack.c.h.b16 %v63
    %v144 = vunpack.c.l.b16 %v64
    %v145 = vunpack.c.l.b16 %v65
    %v146 = vunpack.c.h.b16 %v65
    %v147 = vunpack.c.l.b16 %v66
    %v148 = vunpack.c.l.b16 %v67
    %v149 = vunpack.c.h.b16 %v67
    %v150 = vunpack.c.l.b16 %v68
    %v151 = vpack.c.b16 %v142, %v139
    %v152 = vpack.c.b16 %v143, %v140
    %v153 = vpack.c.b16 %v144, %v141
    %v154 = vpack.c.b16 %v148, %v145
    %v155 = vpack.c.b16 %v149, %v146
    %v156 = vpack.c.b16 %v150, %v147
    %vm163 = vcmask 261120
    %v165 = vsel %vm163, %v130, 0
    %167 = vmatpush.bf16.msra.mxu0 0
    %168 = vmatpush.bf16.msra.mxu0 0
    %169 = vmatpush.bf16.msra.mxu0 0
    %170 = vmatpush.bf16.msra.mxu0 0
    %171 = vmatpush.bf16.msra.mxu0 0
    %172 = vmatpush.bf16.msra.mxu0 0
    %173 = vmatpush.bf16.msra.mxu0 %v154
    %174 = vmatpush.bf16.msra.mxu0 %v151
    %175 = vmatmul.bf16.gmra.mxu0 %v165
    %v176 = vpop.f32.mrf.mxu0
    %v177 = vadd.f32 %v87, %v176
    %v178 = vpop.f32.mrf.mxu0
    %179 = vdwg.mxu0
    %180 = vmatpush.bf16.msra.mxu0 0
    %181 = vmatpush.bf16.msra.mxu0 0
    %182 = vmatpush.bf16.msra.mxu0 0
    %183 = vmatpush.bf16.msra.mxu0 0
    %184 = vmatpush.bf16.msra.mxu0 0
    %185 = vmatpush.bf16.msra.mxu0 0
    %186 = vmatpush.bf16.msra.mxu0 %v155
    %187 = vmatpush.bf16.msra.mxu0 %v152
    %188 = vmatmul.bf16.gmra.mxu0 %v165
    %v189 = vpop.f32.mrf.mxu0
    %v190 = vadd.f32 %v88, %v189
    %v191 = vpop.f32.mrf.mxu0
    %192 = vdwg.mxu0
    %193 = vmatpush.bf16.msra.mxu0 0
    %194 = vmatpush.bf16.msra.mxu0 0
    %195 = vmatpush.bf16.msra.mxu0 0
    %196 = vmatpush.bf16.msra.mxu0 0
    %197 = vmatpush.bf16.msra.mxu0 0
    %198 = vmatpush.bf16.msra.mxu0 0
    %199 = vmatpush.bf16.msra.mxu0 %v156
    %200 = vmatpush.bf16.msra.mxu0 %v153
    %201 = vmatmul.bf16.gmra.mxu0 %v165
    %v202 = vpop.f32.mrf.mxu0
    %v203 = vadd.f32 %v89, %v202
    %v204 = vpop.f32.mrf.mxu0
    %205 = vdwg.mxu0
    %v206 = vpack.c.bf16 %v190, %v177
    %v207 = vpack.c.bf16 %v203, %v203
    %v209 = vunpack.c.h.b16 %v206
    %v210 = vpack.c.b16 %v209, %v209
    %212 = vmatpush.bf16.xpose.msra.mxu0 0
    %213 = vmatpush.bf16.xpose.msra.mxu0 0
    %214 = vmatpush.bf16.xpose.msra.mxu0 0
    %215 = vmatpush.bf16.xpose.msra.mxu0 0
    %216 = vmatpush.bf16.xpose.msra.mxu0 0
    %217 = vmatpush.bf16.xpose.msra.mxu0 0
    %218 = vmatpush.bf16.xpose.msra.mxu0 0
    %219 = vmatpush.bf16.xpose.msra.mxu0 %v210
    %220 = vmatmul.bf16.gmra.mxu0 %v206
    %v221 = vpop.f32.mrf.mxu0
    %v222 = vadd.f32 0.0, %v221
    %v223 = vpop.f32.mrf.mxu0
    %224 = vdwg.mxu0
    %vm225 = vcmask 64512
    %v226 = vsel %vm225, %v222, -inf
    %227 = vmax.xlane.f32.xlu0 %v226
    %v228 = vpop.xlane.xlu0 %227
    %v229 = vsub.f32 %v222, %v228
    %v230 = vmul.f32 %v229, 1.442695
    %v231 = vpow.pop %v230
    %v232 = vsel %vm225, %v231, 0.0
    %233 = vadd.xlane.f32.xlu0 %v232
    %v234 = vpop.xlane.xlu0 %233
    %v235 = vrcp.pop %v234
    %v236 = vmul.f32 %v231, %v235
    %v237 = vpack.c.bf16 %v236, %v236
    %v239 = vsel %vm225, %v237, 0
    %vm241 = vcmask 1043456
    %v243 = vsel %vm241, %v207, 0
    %245 = vmatpush.bf16.msra.mxu0 0
    %246 = vmatpush.bf16.msra.mxu0 0
    %247 = vmatpush.bf16.msra.mxu0 0
    %248 = vmatpush.bf16.msra.mxu0 0
    %249 = vmatpush.bf16.msra.mxu0 0
    %250 = vmatpush.bf16.msra.mxu0 0
    %251 = vmatpush.bf16.msra.mxu0 0
    %252 = vmatpush.bf16.msra.mxu0 %v243
    %253 = vmatmul.bf16.gmra.mxu0 %v239
    %v254 = vpop.f32.mrf.mxu0
    %v255 = vadd.f32 0.0, %v254
    %v256 = vpop.f32.mrf.mxu0
    %257 = vdwg.mxu0
    %v259 = vrot.slane %v255, 1
    %v260 = vrot.slane %v255, 2
    %v261 = vrot.slane %v255, 3
    %v262 = vrot.slane %v255, 4
    %v263 = vrot.slane %v255, 5
    %v264 = vrot.slane %v255, 6
    %v265 = vrot.slane %v255, 7
    %vm273 = vcmask 253952
    %274 = vst.msk [vmem:[#allocation8] sm:$0x1] %vm273, %v255
    %275 = vst.msk [vmem:[#allocation8 + $0x2] sm:$0x1] %vm273, %v259
    %276 = vst.msk [vmem:[#allocation8 + $0x4] sm:$0x1] %vm273, %v260
    %277 = vst.msk [vmem:[#allocation8 + $0x6] sm:$0x1] %vm273, %v261
    %278 = vst.msk [vmem:[#allocation8 + $0x8] sm:$0x1] %vm273, %v262
    %279 = vst.msk [vmem:[#allocation8 + $0xa] sm:$0x1] %vm273, %v263
    %280 = vst.msk [vmem:[#allocation8 + $0xc] sm:$0x1] %vm273, %v264
    %281 = vst.msk [vmem:[#allocation8 + $0xe] sm:$0x1] %vm273, %v265
    %v282 = vld [vmem:[#allocation2 + $0x1] sm:$0x1]
    %v283 = vld [vmem:[#allocation2 + $0x3] sm:$0x1]
    %v284 = vld [vmem:[#allocation2 + $0x5] sm:$0x1]
    %v285 = vld [vmem:[#allocation2 + $0x7] sm:$0x1]
    %v286 = vld [vmem:[#allocation2 + $0x9] sm:$0x1]
    %v287 = vld [vmem:[#allocation2 + $0xb] sm:$0x1]
    %v288 = vld [vmem:[#allocation2 + $0xd] sm:$0x1]
    %v289 = vld [vmem:[#allocation2 + $0xf] sm:$0x1]
    %v290 = vpack.c.bf16 %v282, %v282
    %v291 = vpack.c.bf16 %v283, %v283
    %v292 = vpack.c.bf16 %v284, %v284
    %v293 = vpack.c.bf16 %v285, %v285
    %v294 = vpack.c.bf16 %v286, %v286
    %v295 = vpack.c.bf16 %v287, %v287
    %v296 = vpack.c.bf16 %v288, %v288
    %v297 = vpack.c.bf16 %v289, %v289
    %v306 = vunpack.c.l.b16 %v290
    %v307 = vunpack.c.l.b16 %v291
    %v308 = vunpack.c.l.b16 %v292
    %v309 = vunpack.c.l.b16 %v293
    %v310 = vunpack.c.l.b16 %v294
    %v311 = vunpack.c.l.b16 %v295
    %v312 = vunpack.c.l.b16 %v296
    %v313 = vunpack.c.l.b16 %v297
    %v314 = vrot.slane %v307, 7
    %v315 = vsel %vm110, %v314, %v306
    %v316 = vrot.slane %v308, 6
    %v317 = vsel %vm113, %v316, %v315
    %v318 = vrot.slane %v309, 5
    %v319 = vsel %vm116, %v318, %v317
    %v320 = vrot.slane %v310, 4
    %v321 = vsel %vm119, %v320, %v319
    %v322 = vrot.slane %v311, 3
    %v323 = vsel %vm122, %v322, %v321
    %v324 = vrot.slane %v312, 2
    %v325 = vsel %vm125, %v324, %v323
    %v326 = vrot.slane %v313, 1
    %v327 = vsel %vm128, %v326, %v325
    %v328 = vpack.c.b16 %v327, %v327
    %v330 = vsel %vm163, %v328, 0
    %332 = vmatpush.bf16.msra.mxu0 0
    %333 = vmatpush.bf16.msra.mxu0 0
    %334 = vmatpush.bf16.msra.mxu0 0
    %335 = vmatpush.bf16.msra.mxu0 0
    %336 = vmatpush.bf16.msra.mxu0 0
    %337 = vmatpush.bf16.msra.mxu0 0
    %338 = vmatpush.bf16.msra.mxu0 %v154
    %339 = vmatpush.bf16.msra.mxu0 %v151
    %340 = vmatmul.bf16.gmra.mxu0 %v330
    %v341 = vpop.f32.mrf.mxu0
    %v342 = vadd.f32 %v87, %v341
    %v343 = vpop.f32.mrf.mxu0
    %344 = vdwg.mxu0
    %345 = vmatpush.bf16.msra.mxu0 0
    %346 = vmatpush.bf16.msra.mxu0 0
    %347 = vmatpush.bf16.msra.mxu0 0
    %348 = vmatpush.bf16.msra.mxu0 0
    %349 = vmatpush.bf16.msra.mxu0 0
    %350 = vmatpush.bf16.msra.mxu0 0
    %351 = vmatpush.bf16.msra.mxu0 %v155
    %352 = vmatpush.bf16.msra.mxu0 %v152
    %353 = vmatmul.bf16.gmra.mxu0 %v330
    %v354 = vpop.f32.mrf.mxu0
    %v355 = vadd.f32 %v88, %v354
    %v356 = vpop.f32.mrf.mxu0
    %357 = vdwg.mxu0
    %358 = vmatpush.bf16.msra.mxu0 0
    %359 = vmatpush.bf16.msra.mxu0 0
    %360 = vmatpush.bf16.msra.mxu0 0
    %361 = vmatpush.bf16.msra.mxu0 0
    %362 = vmatpush.bf16.msra.mxu0 0
    %363 = vmatpush.bf16.msra.mxu0 0
    %364 = vmatpush.bf16.msra.mxu0 %v156
    %365 = vmatpush.bf16.msra.mxu0 %v153
    %366 = vmatmul.bf16.gmra.mxu0 %v330
    %v367 = vpop.f32.mrf.mxu0
    %v368 = vadd.f32 %v89, %v367
    %v369 = vpop.f32.mrf.mxu0
    %370 = vdwg.mxu0
    %v371 = vpack.c.bf16 %v355, %v342
    %v372 = vpack.c.bf16 %v368, %v368
    %v374 = vunpack.c.h.b16 %v371
    %v375 = vpack.c.b16 %v374, %v374
    %377 = vmatpush.bf16.xpose.msra.mxu0 0
    %378 = vmatpush.bf16.xpose.msra.mxu0 0
    %379 = vmatpush.bf16.xpose.msra.mxu0 0
    %380 = vmatpush.bf16.xpose.msra.mxu0 0
    %381 = vmatpush.bf16.xpose.msra.mxu0 0
    %382 = vmatpush.bf16.xpose.msra.mxu0 0
    %383 = vmatpush.bf16.xpose.msra.mxu0 0
    %384 = vmatpush.bf16.xpose.msra.mxu0 %v375
    %385 = vmatmul.bf16.gmra.mxu0 %v371
    %v386 = vpop.f32.mrf.mxu0
    %v387 = vadd.f32 0.0, %v386
    %v388 = vpop.f32.mrf.mxu0
    %389 = vdwg.mxu0
    %v390 = vsel %vm225, %v387, -inf
    %391 = vmax.xlane.f32.xlu0 %v390
    %v392 = vpop.xlane.xlu0 %391
    %v393 = vsub.f32 %v387, %v392
    %v394 = vmul.f32 %v393, 1.442695
    %v395 = vpow.pop %v394
    %v396 = vsel %vm225, %v395, 0.0
    %397 = vadd.xlane.f32.xlu0 %v396
    %v398 = vpop.xlane.xlu0 %397
    %v399 = vrcp.pop %v398
    %v400 = vmul.f32 %v395, %v399
    %v401 = vpack.c.bf16 %v400, %v400
    %v403 = vsel %vm225, %v401, 0
    %v406 = vsel %vm241, %v372, 0
    %408 = vmatpush.bf16.msra.mxu0 0
    %409 = vmatpush.bf16.msra.mxu0 0
    %410 = vmatpush.bf16.msra.mxu0 0
    %411 = vmatpush.bf16.msra.mxu0 0
    %412 = vmatpush.bf16.msra.mxu0 0
    %413 = vmatpush.bf16.msra.mxu0 0
    %414 = vmatpush.bf16.msra.mxu0 0
    %415 = vmatpush.bf16.msra.mxu0 %v406
    %416 = vmatmul.bf16.gmra.mxu0 %v403
    %v417 = vpop.f32.mrf.mxu0
    %v418 = vadd.f32 0.0, %v417
    %v419 = vpop.f32.mrf.mxu0
    %420 = vdwg.mxu0
    %v422 = vrot.slane %v418, 1
    %v423 = vrot.slane %v418, 2
    %v424 = vrot.slane %v418, 3
    %v425 = vrot.slane %v418, 4
    %v426 = vrot.slane %v418, 5
    %v427 = vrot.slane %v418, 6
    %v428 = vrot.slane %v418, 7
    %436 = vst.msk [vmem:[#allocation8 + $0x1] sm:$0x1] %vm273, %v418
    %437 = vst.msk [vmem:[#allocation8 + $0x3] sm:$0x1] %vm273, %v422
    %438 = vst.msk [vmem:[#allocation8 + $0x5] sm:$0x1] %vm273, %v423
    %439 = vst.msk [vmem:[#allocation8 + $0x7] sm:$0x1] %vm273, %v424
    %440 = vst.msk [vmem:[#allocation8 + $0x9] sm:$0x1] %vm273, %v425
    %441 = vst.msk [vmem:[#allocation8 + $0xb] sm:$0x1] %vm273, %v426
    %442 = vst.msk [vmem:[#allocation8 + $0xd] sm:$0x1] %vm273, %v427
    %443 = vst.msk [vmem:[#allocation8 + $0xf] sm:$0x1] %vm273, %v428
    // Predicated region
    $region26: #{tpu_custom_call.1} parent=1 // pred_check
      _
    $region27: #{tpu_custom_call.1} parent=1 // pred_check_branch
      %445 = sbr.rel (0) target = $region29
    $region28: #{tpu_custom_call.1} parent=1 // pred_region
      %447 = vsyncadd [#allocation4], 0
      %s448 = sshll.u32 [#allocation8], 4
      %s449 = int_to_ptr.vmem [resolvable:$true] %s448
      %s450 = sshll.u32 %s3, 4
      %s451 = int_to_ptr.hbm [resolvable:$true] %s450
      %456 = dma.vmem_to_hbm [thread:$0]  %s449, 256, %s451, [#allocation4], 32, 32, 2
    $region29: #{tpu_custom_call.1} parent=1 // pred_fallthru
      _
    // Predicated region
    $region30: #{tpu_custom_call.1} parent=1 // pred_check
      _
    $region31: #{tpu_custom_call.1} parent=1 // pred_check_branch
      %458 = sbr.rel (0) target = $region33
    $region32: #{tpu_custom_call.1} parent=1 // pred_region
      %460 = dma.done [#allocation4], 256
    $region33: #{tpu_custom_call.1} parent=1 // pred_fallthru
      _
    %461 = vsyncpa [#allocation3], 1
    %462 = vsyncpa [#allocation6], 1
    %463 = vsyncpa [#allocation4], 1

</llo_original>
